<compile_context>
chip_gen: v5e
topology: v5e:2x2
jax: 0.10.0
libtpu: 0.0.40
codegen_flags: <defaults>
</compile_context>

<pallas_src>
import functools
import numpy as np
import jax
import jax.numpy as jnp
from jax import lax
from jax.experimental import pallas as pl
from jax.experimental.pallas import tpu as pltpu


LEAKY_SLOPE = 0.2
ACT_SCALE = float(2.0 ** 0.5)

# Backend errors that legitimately trigger a configuration fallback (narrowed per review;
# plain Python bugs like AssertionError/KeyError still surface immediately).
_FALLBACK_ERRORS = (
    pltpu.LoweringException,     # Mosaic rejected an op (e.g. sublane roll)
    jax.errors.JaxRuntimeError,  # backend / Mosaic compile failure
    NotImplementedError,
    ValueError,
    TypeError,
    AttributeError,              # e.g. pl.Buffered missing on an older jax
)


def _leaky(x):
    # leaky_relu(., 0.2); the sqrt(2) gain is pre-folded into weights/biases.
    return jnp.maximum(x, LEAKY_SLOPE * x)


def actconv2d_kernel(x_ref, wband_ref, b1_ref, w2_ref, b2_ref, o_ref,
                     *, ksize, kpad, use_roll):
    """One grid step = one tile of batch elements, packed into a single row slab.

    x_ref    : (1, rows, kpad)          row-packed padded input (kpad = lane-padded Wp*Cin)
    wband_ref: (ksize*kpad, Wo*Cout)    banded 3x3 weights (kx, Cin folded in), tap rows stacked
    b1_ref   : (1, Wo*Cout)             sqrt2*(conv1 bias + act bias), tiled over Wo
    w2_ref   : (Wo*Cout, Wo*Cout)       block-diagonal 1x1 weights * sqrt2
    b2_ref   : (1, Wo*Cout)             sqrt2*(conv2 bias + act bias), tiled over Wo
    o_ref    : (1, rows, Wo*Cout)       lane-dense output slab
    """
    rows = x_ref.shape[1]
    x_all = x_ref[0]                                     # (rows, kpad), lane-dense

    if use_roll:
        # Tap-row shifts are sublane rotates (XLU slot, no relayout copies); the rolled
        # copies are lane-concatenated at 128-aligned offsets so the whole 3x3 conv is
        # ONE K=ksize*kpad matmul (single MXU weight push per grid step).  Rows that mix
        # batches / padding / wraparound only land in junk output rows the wrapper drops.
        parts = [x_all]
        for ky in range(1, ksize):
            parts.append(pltpu.roll(x_all, shift=rows - ky, axis=0))
        x_cat = jnp.concatenate(parts, axis=-1)          # (rows, ksize*kpad)
        acc = jnp.dot(x_cat, wband_ref[...], preferred_element_type=jnp.float32)
        out_rows = rows
    else:
        # Fallback (no sublane roll): slab-wide windows -> ksize matmuls at M ~= rows
        # (instead of per-(batch, tap-row) matmuls at M = 16).
        out_rows = rows - (ksize - 1)
        acc = jnp.zeros((out_rows, o_ref.shape[-1]), jnp.float32)
        for ky in range(ksize):
            win = x_all[ky:ky + out_rows, :]
            acc = acc + jnp.dot(win, wband_ref[ky * kpad:(ky + 1) * kpad, :],
                                preferred_element_type=jnp.float32)

    a1 = _leaky(acc + b1_ref[...])                       # activation #1 (scale folded)
    q2 = jnp.dot(a1, w2_ref[...], preferred_element_type=jnp.float32) + b2_ref[...]
    z = _leaky(q2)                                       # activation #2 (scale folded)

    # Single contiguous lane-dense store (full slab on the roll path).
    o_ref[0, 0:out_rows, :] = z.astype(o_ref.dtype)


def act_conv2d(x_nchw, w1, b1, w2, b2, act_bias, *, pad=0, b_tile=None,
               use_roll=True, weight_buffers=1):
    """Forward pass of ActConv2d.

    x_nchw : (N, Cin, H, W) f32      w1: (Cout, Cin, K, K)   b1: (Cout,)
    w2     : (Cout, Cout, 1, 1)      b2: (Cout,)             act_bias: (Cout,)
    """
    n, cin, h, w = x_nchw.shape
    cout, _, k, _ = w1.shape
    hp, wp = h + pad, w + pad
    ho, wo = hp - (k - 1), wp - (k - 1)
    n_in = wp * cin
    n_out = wo * cout
    kpad = -(-n_in // 128) * 128          # lane-pad contraction depth to full vregs / MXU columns

    # ---- wrapper-side layout (tiny tensors at these sizes) ----
    # NCHW -> NHWC -> replicate-pad right/bottom (F.pad((0,pad,0,pad),'replicate'))
    # -> rows of (Wp*Cin), zero lane-padded to kpad.
    x = jnp.transpose(x_nchw, (0, 2, 3, 1))
    x = jnp.pad(x, ((0, 0), (0, pad), (0, pad), (0, 0)), mode="edge")
    x = x.reshape(n, hp, n_in)
    hp_pad = -(-hp // 8) * 8              # round rows up to a sublane multiple
    x = jnp.pad(x, ((0, 0), (0, hp_pad - hp), (0, kpad - n_in)))

    # ---- batch tiling: prefer >=2 grid steps (pipelining + v7x megacore) while
    #      targeting large matmul M per step (M is batch-limited at tiny N). ----
    if b_tile is None:
        target_rows = 256
        divs = [d for d in range(1, n + 1) if n % d == 0]
        cands = [d for d in divs if n // d >= 2] or divs
        fitting = [d for d in cands if d * hp_pad <= target_rows]
        b_tile = max(fitting) if fitting else min(cands)
    b_tile = min(b_tile, n)
    assert n % b_tile == 0
    num_tiles = n // b_tile
    rows = b_tile * hp_pad
    x = x.reshape(num_tiles, rows, kpad)

    # ---- fold weights / biases host-side ----
    # wband[ky][(wo+kx)*Cin + ci, wo*Cout + co] = sqrt2 * w1[co, ci, ky, kx]
    wband = jnp.stack([
        sum(jnp.kron(jnp.eye(wp, wo, k=-kx, dtype=jnp.float32),
                     jnp.transpose(w1[:, :, ky, kx]))
            for kx in range(k))
        for ky in range(k)
    ]) * ACT_SCALE                                                  # (K, Wp*Cin, Wo*Cout)
    wband = jnp.pad(wband, ((0, 0), (0, kpad - n_in), (0, 0)))      # zero rows for padded lanes
    wband_flat = wband.reshape(k * kpad, n_out)                     # (K*kpad, Wo*Cout)
    w2_big = jnp.kron(jnp.eye(wo, dtype=jnp.float32),
                      jnp.transpose(w2[:, :, 0, 0])) * ACT_SCALE    # (Wo*Cout, Wo*Cout)
    b1_row = (ACT_SCALE * jnp.tile(b1 + act_bias, wo)).reshape(1, n_out)
    b2_row = (ACT_SCALE * jnp.tile(b2 + act_bias, wo)).reshape(1, n_out)

    kernel = functools.partial(actconv2d_kernel, ksize=k, kpad=kpad, use_roll=use_roll)

    def const_spec(shape):
        # Grid-invariant operands: single-buffer to avoid doubling weight VMEM residency.
        if weight_buffers == 1:
            return pl.BlockSpec(shape, lambda i: (0,) * len(shape),
                                pipeline_mode=pl.Buffered(1))
        return pl.BlockSpec(shape, lambda i: (0,) * len(shape))

    out_packed = pl.pallas_call(
        kernel,
        out_shape=jax.ShapeDtypeStruct((num_tiles, rows, n_out), jnp.float32),
        grid_spec=pltpu.PrefetchScalarGridSpec(
            num_scalar_prefetch=0,
            grid=(num_tiles,),
            in_specs=[
                pl.BlockSpec((1, rows, kpad), lambda i: (i, 0, 0)),
                const_spec((k * kpad, n_out)),
                const_spec((1, n_out)),
                const_spec((n_out, n_out)),
                const_spec((1, n_out)),
            ],
            out_specs=pl.BlockSpec((1, rows, n_out), lambda i: (i, 0, 0)),
        ),
        compiler_params=pltpu.CompilerParams(
            dimension_semantics=("parallel",)),
    )(x, wband_flat, b1_row, w2_big, b2_row)

    # single contiguous slab -> strip per-batch junk rows in the wrapper -> NCHW
    out = out_packed.reshape(n, hp_pad, wo, cout)[:, :ho]
    return jnp.transpose(out, (0, 3, 1, 2))
    # TODO(synk): the banded formulation is O(W^2) in weight VMEM / MXU flops; before
    # production spatial sizes add a W-tile grid axis (Wt*Cout = 128 on v5e, 256 on
    # v6e/v7x) with a (Wt+K-1)-column input halo in the index_map and per-tile banded
    # blocks, and fuse the replicate pad into the kernel instead of the wrapper jnp.pad.


def _reference(x_nchw, w1, b1, w2, b2, act_bias, *, pad=0):
    """Pure-JAX reference matching the PyTorch forward (for validation)."""
    x = jnp.pad(x_nchw, ((0, 0), (0, 0), (0, pad), (0, pad)), mode="edge")
    y = lax.conv_general_dilated(x, w1, window_strides=(1, 1), padding="VALID",
                                 dimension_numbers=("NCHW", "OIHW", "NCHW"))
    y = y + b1.reshape(1, -1, 1, 1) + act_bias.reshape(1, -1, 1, 1)
    y = jnp.where(y >= 0, y, LEAKY_SLOPE * y) * ACT_SCALE
    z = lax.conv_general_dilated(y, w2, window_strides=(1, 1), padding="VALID",
                                 dimension_numbers=("NCHW", "OIHW", "NCHW"))
    z = z + b2.reshape(1, -1, 1, 1) + act_bias.reshape(1, -1, 1, 1)
    z = jnp.where(z >= 0, z, LEAKY_SLOPE * z) * ACT_SCALE
    return z


if __name__ == "__main__":
    # batch=2, in_ch=4, out_ch=8, spatial=16, kernel=3, one-sided pad=2 -> out (2, 8, 16, 16)
    N, CIN, COUT, H, W, K, PAD = 2, 4, 8, 16, 16, 3, 2

    key = jax.random.PRNGKey(0)
    kx_, k1, kb1, k2, kb2, kab = jax.random.split(key, 6)
    x = jax.random.normal(kx_, (N, CIN, H, W), jnp.float32)
    w1 = 0.1 * jax.random.normal(k1, (COUT, CIN, K, K), jnp.float32)
    b1 = 0.1 * jax.random.normal(kb1, (COUT,), jnp.float32)
    w2 = 0.1 * jax.random.normal(k2, (COUT, COUT, 1, 1), jnp.float32)
    b2 = 0.1 * jax.random.normal(kb2, (COUT,), jnp.float32)
    act_bias = 0.1 * jax.random.normal(kab, (COUT,), jnp.float32)

    ref = jax.block_until_ready(_reference(x, w1, b1, w2, b2, act_bias, pad=PAD))

    # Config cascade: fastest config first; each candidate is validated against the
    # reference, and we fall through only on expected backend errors (see _FALLBACK_ERRORS).
    configs = (
        dict(use_roll=True, weight_buffers=1),   # fused K=3*128 matmul + single-buffered weights
        dict(use_roll=True, weight_buffers=2),   # in case pl.Buffered(1) is unsupported
        dict(use_roll=False, weight_buffers=2),  # in case sublane pltpu.roll is unsupported
    )
    out = None
    for cfg in configs:
        try:
            cand = jax.block_until_ready(
                act_conv2d(x, w1, b1, w2, b2, act_bias, pad=PAD, **cfg))
        except _FALLBACK_ERRORS:
            continue
        if np.allclose(np.asarray(cand), np.asarray(ref), rtol=1e-4, atol=1e-4):
            out = cand
            break

    assert out is not None, "no kernel configuration produced a matching result"
    assert out.shape == (N, COUT, H, W), out.shape
    np.testing.assert_allclose(np.asarray(out), np.asarray(ref), rtol=1e-4, atol=1e-4)
    print("KERNEL_OK")
</pallas_src>

<mosaic_0001>
module attributes {stable_mosaic.version = 11 : i64} {
  func.func @actconv2d_kernel(%arg0: i32, %arg1: memref<1x24x128xf32, #tpu.memory_space<vmem>>, %arg2: memref<384x128xf32, #tpu.memory_space<vmem>>, %arg3: memref<1x128xf32, #tpu.memory_space<vmem>>, %arg4: memref<128x128xf32, #tpu.memory_space<vmem>>, %arg5: memref<1x128xf32, #tpu.memory_space<vmem>>, %arg6: memref<1x24x128xf32, #tpu.memory_space<vmem>>) attributes {dimension_semantics = [#tpu.dimension_semantics<parallel>], iteration_bounds = array<i64: 2>, scalar_prefetch = 0 : i64, scratch_operands = 0 : i64, tpu.core_type = #tpu.core_type<tc>, window_params = [{transform_indices = @transform_0, window_bounds = array<i64: 1, 24, 128>}, {pipeline_mode = #tpu.pipeline_mode<synchronous>, transform_indices = @transform_1, window_bounds = array<i64: 384, 128>}, {pipeline_mode = #tpu.pipeline_mode<synchronous>, transform_indices = @transform_2, window_bounds = array<i64: 1, 128>}, {pipeline_mode = #tpu.pipeline_mode<synchronous>, transform_indices = @transform_3, window_bounds = array<i64: 128, 128>}, {pipeline_mode = #tpu.pipeline_mode<synchronous>, transform_indices = @transform_4, window_bounds = array<i64: 1, 128>}, {transform_indices = @transform_5, window_bounds = array<i64: 1, 24, 128>}]} {
    %c0 = arith.constant 0 : index
    %c0_0 = arith.constant 0 : index
    %c0_1 = arith.constant 0 : index
    %0 = vector.load %arg1[%c0, %c0_0, %c0_1] : memref<1x24x128xf32, #tpu.memory_space<vmem>>, vector<1x24x128xf32>
    %1 = vector.shape_cast %0 : vector<1x24x128xf32> to vector<24x128xf32>
    %c23_i32 = arith.constant 23 : i32
    %2 = tpu.dynamic_rotate %1 by %c23_i32 dim 0 : vector<24x128xf32>, i32 -> vector<24x128xf32>
    %c22_i32 = arith.constant 22 : i32
    %3 = tpu.dynamic_rotate %1 by %c22_i32 dim 0 : vector<24x128xf32>, i32 -> vector<24x128xf32>
    %4 = tpu.concatenate %1, %2, %3 in 1 : vector<24x128xf32>, vector<24x128xf32>, vector<24x128xf32> -> vector<24x384xf32>
    %c0_2 = arith.constant 0 : index
    %c0_3 = arith.constant 0 : index
    %5 = vector.load %arg2[%c0_2, %c0_3] : memref<384x128xf32, #tpu.memory_space<vmem>>, vector<384x128xf32>
    %cst = arith.constant dense<0.000000e+00> : vector<24x128xf32>
    %6 = tpu.matmul %4, %5, %cst {dimension_numbers = #tpu.dot_dimension_numbers<[1], [0], [0], [1], [0, 0, 1, 1], [], []>} : vector<24x384xf32>, vector<384x128xf32>, vector<24x128xf32> -> vector<24x128xf32>
    %c0_4 = arith.constant 0 : index
    %c0_5 = arith.constant 0 : index
    %7 = vector.load %arg3[%c0_4, %c0_5] : memref<1x128xf32, #tpu.memory_space<vmem>>, vector<1x128xf32>
    %8 = vector.broadcast %7 : vector<1x128xf32> to vector<24x128xf32>
    %9 = arith.addf %6, %8 : vector<24x128xf32>
    %cst_6 = arith.constant 2.000000e-01 : f32
    %10 = vector.broadcast %cst_6 : f32 to vector<24x128xf32>
    %11 = arith.mulf %10, %9 : vector<24x128xf32>
    %12 = arith.maximumf %9, %11 : vector<24x128xf32>
    %c0_7 = arith.constant 0 : index
    %c0_8 = arith.constant 0 : index
    %13 = vector.load %arg4[%c0_7, %c0_8] : memref<128x128xf32, #tpu.memory_space<vmem>>, vector<128x128xf32>
    %cst_9 = arith.constant dense<0.000000e+00> : vector<24x128xf32>
    %14 = tpu.matmul %12, %13, %cst_9 {dimension_numbers = #tpu.dot_dimension_numbers<[1], [0], [0], [1], [0, 0, 1, 1], [], []>} : vector<24x128xf32>, vector<128x128xf32>, vector<24x128xf32> -> vector<24x128xf32>
    %c0_10 = arith.constant 0 : index
    %c0_11 = arith.constant 0 : index
    %15 = vector.load %arg5[%c0_10, %c0_11] : memref<1x128xf32, #tpu.memory_space<vmem>>, vector<1x128xf32>
    %16 = vector.broadcast %15 : vector<1x128xf32> to vector<24x128xf32>
    %17 = arith.addf %14, %16 : vector<24x128xf32>
    %cst_12 = arith.constant 2.000000e-01 : f32
    %18 = vector.broadcast %cst_12 : f32 to vector<24x128xf32>
    %19 = arith.mulf %18, %17 : vector<24x128xf32>
    %20 = arith.maximumf %17, %19 : vector<24x128xf32>
    %c0_13 = arith.constant 0 : index
    %c0_14 = arith.constant 0 : index
    %c0_15 = arith.constant 0 : index
    %21 = vector.load %arg6[%c0_13, %c0_14, %c0_15] : memref<1x24x128xf32, #tpu.memory_space<vmem>>, vector<1x24x128xf32>
    %22 = vector.shape_cast %21 : vector<1x24x128xf32> to vector<24x128xf32>
    %23 = vector.shape_cast %20 : vector<24x128xf32> to vector<1x24x128xf32>
    tpu.vector_store %arg6[%c0_13, %c0_14, %c0_15], %23 {strides = array<i32>} : memref<1x24x128xf32, #tpu.memory_space<vmem>>, vector<1x24x128xf32>,
    return
  }
  func.func @transform_0(%arg0: i32) -> (i32, i32, i32) {
    %c0_i32 = arith.constant 0 : i32
    %c0_i32_0 = arith.constant 0 : i32
    %c0_i32_1 = arith.constant 0 : i32
    return %arg0, %c0_i32, %c0_i32_0 : i32, i32, i32
  }
  func.func @transform_1(%arg0: i32) -> (i32, i32) {
    %c0_i32 = arith.constant 0 : i32
    %c0_i32_0 = arith.constant 0 : i32
    %c0_i32_1 = arith.constant 0 : i32
    return %c0_i32, %c0_i32_0 : i32, i32
  }
  func.func @transform_2(%arg0: i32) -> (i32, i32) {
    %c0_i32 = arith.constant 0 : i32
    %c0_i32_0 = arith.constant 0 : i32
    %c0_i32_1 = arith.constant 0 : i32
    return %c0_i32, %c0_i32_0 : i32, i32
  }
  func.func @transform_3(%arg0: i32) -> (i32, i32) {
    %c0_i32 = arith.constant 0 : i32
    %c0_i32_0 = arith.constant 0 : i32
    %c0_i32_1 = arith.constant 0 : i32
    return %c0_i32, %c0_i32_0 : i32, i32
  }
  func.func @transform_4(%arg0: i32) -> (i32, i32) {
    %c0_i32 = arith.constant 0 : i32
    %c0_i32_0 = arith.constant 0 : i32
    %c0_i32_1 = arith.constant 0 : i32
    return %c0_i32, %c0_i32_0 : i32, i32
  }
  func.func @transform_5(%arg0: i32) -> (i32, i32, i32) {
    %c0_i32 = arith.constant 0 : i32
    %c0_i32_0 = arith.constant 0 : i32
    %c0_i32_1 = arith.constant 0 : i32
    return %arg0, %c0_i32, %c0_i32_0 : i32, i32, i32
  }
}

</mosaic_0001>

<llo_original>
// kernel: tpu_custom_call.1
$region0: #{tpu_custom_call.1}
  #allocation0 [shape = 'u32[]', space=smem, size = 0x4, offset = 0x4, fixed_abs, tag = 'smem constant byte address 0x4 - core index']
  #allocation1 [shape = 'u32[72,128]{1,0:T(1,128)}', space=vmem, size = 0x9000, scoped, tag = 'internal scratch']
  %s0 = inlined_call_operand.hbm [shape: f32[2,24,128], index: 0, kind: input, shape index: {}]
  %s1 = inlined_call_operand.hbm [shape: f32[384,128], index: 1, kind: input, shape index: {}]
  %s2 = inlined_call_operand.vmem [shape: f32[1,128], index: 2, kind: input, shape index: {}]
  %s3 = inlined_call_operand.hbm [shape: f32[128,128], index: 3, kind: input, shape index: {}]
  %s4 = inlined_call_operand.vmem [shape: f32[1,128], index: 4, kind: input, shape index: {}]
  %s5 = inlined_call_operand.hbm [shape: f32[2,24,128], index: 5, kind: output, shape index: {}]
  %s6 = sld [smem:[#allocation0]]
  $region65: #{tpu_custom_call.1} parent=0
    _
  %s8 = ssub.s32 1, %s6
  %s9 = scalar_select 0, %s8, %s6
  $region1: #{tpu_custom_call.1} parent=0
    #allocation2 [shape = 'u8[24576]{0}', space=vmem, size = 0x6000, scoped, tag = 'input window, operand 0']
    #allocation3 [shape = 's32[2]{0}', space=sflag, size = 0x8, scoped, tag = 'scoped memory for tpu_custom_call.1']
    #allocation4 [shape = 's32[2]{0}', space=sflag, size = 0x8, scoped, tag = 'scoped memory for tpu_custom_call.1']
    #allocation5 [shape = 'u8[196608]{0}', space=vmem, size = 0x30000, scoped, tag = 'input window, operand 1, single buffered']
    #allocation6 [shape = 's32[1]{0}', space=sflag, size = 0x4, scoped, tag = 'scoped memory for tpu_custom_call.1']
    #allocation7 [shape = 'u8[65536]{0}', space=vmem, size = 0x10000, scoped, tag = 'input window, operand 3, single buffered']
    #allocation8 [shape = 'u8[24576]{0}', space=vmem, size = 0x6000, scoped, tag = 'output window, operand 0']
    %10 = vsyncpa [#allocation3], 0
    %s11 = scalar_lea.sflag [#allocation3], 1
    %12 = vsyncpa %s11, 0
    %13 = vsyncpa [#allocation6], 0
    %14 = vsyncpa [#allocation4], 0
    %s15 = scalar_lea.sflag [#allocation4], 1
    %16 = vsyncpa %s15, 0
    loop: start=0, step=1, limit=4
    $region2: #{tpu_custom_call.1} parent=1 // loop_pre_header
      _
    $region3: #{tpu_custom_call.1} parent=1 // loop_header
      %s18 = sphi 0, %s22
      %p19 = scmp.ge.s32.totalorder %s18, 4
      %s28 = sphi 0, %s30
      %s31 = sphi 0, %s28
      %s32 = sphi 0, %s31
      %s48 = sphi 0, %s32
      %s52 = sphi 0, %s52
      %s54 = sphi 0, %s52
      %s55 = sphi 0, %s54
      %s69 = sphi 0, %s55
      %s73 = sphi 0, %s73
      %s75 = sphi 0, %s73
      %s76 = sphi 0, %s75
      %s90 = sphi 0, %s76
      %s94 = sphi 0, %s94
      %s96 = sphi 0, %s94
      %s97 = sphi 0, %s96
      %s111 = sphi 0, %s97
      %s115 = sphi 0, %s115
      %s117 = sphi 0, %s115
      %s118 = sphi 0, %s117
      %s132 = sphi 0, %s118
      %s138 = sphi 0, %s140
      %s141 = sphi 0, %s138
      %s142 = sphi 0, %s141
      %s158 = sphi 0, %s142
    $region4: #{tpu_custom_call.1} parent=1 // loop_header_branch
      %21 = sbr.rel (%p19) target = $region8
    $region5: #{tpu_custom_call.1} parent=1 // loop_body
      %s23 = ssub.s32 %s18, 1
      %s24 = ssub.s32 %s18, 2
      %s25 = sadd.s32 %s18, 1
      %s26 = ssub.s32 %s18, %s25
      %p27 = scmp.eq.s32.totalorder %s26, 0
      %s29 = sadd.s32 %s28, 1
      %s30 = scalar_select %p27, %s28, %s29
      %p33 = pneg %p27
      %p34 = scmp.eq.s32.totalorder %s18, 1
      %p35 = por %p33, %p34
      %p36 = scmp.ne.s32.totalorder %s28, %s31
      %p37 = scmp.eq.s32.totalorder %s18, 0
      %p38 = por %p36, %p37
      %p39 = scmp.ne.s32.totalorder %s28, %s31
      %p40 = scmp.eq.s32.totalorder %s23, 1
      %p41 = por %p39, %p40
      %p42 = scmp.ne.s32.totalorder %s31, %s32
      %p43 = scmp.eq.s32.totalorder %s23, 0
      %p44 = por %p42, %p43
      %p45 = scmp.ne.s32.totalorder %s31, %s32
      %p46 = scmp.eq.s32.totalorder %s24, 1
      %p47 = por %p45, %p46
      %p49 = scmp.ne.s32.totalorder %s32, %s48
      %p50 = scmp.eq.s32.totalorder %s24, 0
      %p51 = por %p49, %p50
      %s53 = sadd.s32 %s52, 1
      %p56 = scmp.eq.s32.totalorder %s18, 1
      %p57 = scmp.ne.s32.totalorder %s52, %s54
      %p58 = scmp.eq.s32.totalorder %s18, 0
      %p59 = por %p57, %p58
      %p60 = scmp.ne.s32.totalorder %s52, %s54
      %p61 = scmp.eq.s32.totalorder %s23, 1
      %p62 = por %p60, %p61
      %p63 = scmp.ne.s32.totalorder %s54, %s55
      %p64 = scmp.eq.s32.totalorder %s23, 0
      %p65 = por %p63, %p64
      %p66 = scmp.ne.s32.totalorder %s54, %s55
      %p67 = scmp.eq.s32.totalorder %s24, 1
      %p68 = por %p66, %p67
      %p70 = scmp.ne.s32.totalorder %s55, %s69
      %p71 = scmp.eq.s32.totalorder %s24, 0
      %p72 = por %p70, %p71
      %s74 = sadd.s32 %s73, 1
      %p77 = scmp.eq.s32.totalorder %s18, 1
      %p78 = scmp.ne.s32.totalorder %s73, %s75
      %p79 = scmp.eq.s32.totalorder %s18, 0
      %p80 = por %p78, %p79
      %p81 = scmp.ne.s32.totalorder %s73, %s75
      %p82 = scmp.eq.s32.totalorder %s23, 1
      %p83 = por %p81, %p82
      %p84 = scmp.ne.s32.totalorder %s75, %s76
      %p85 = scmp.eq.s32.totalorder %s23, 0
      %p86 = por %p84, %p85
      %p87 = scmp.ne.s32.totalorder %s75, %s76
      %p88 = scmp.eq.s32.totalorder %s24, 1
      %p89 = por %p87, %p88
      %p91 = scmp.ne.s32.totalorder %s76, %s90
      %p92 = scmp.eq.s32.totalorder %s24, 0
      %p93 = por %p91, %p92
      %s95 = sadd.s32 %s94, 1
      %p98 = scmp.eq.s32.totalorder %s18, 1
      %p99 = scmp.ne.s32.totalorder %s94, %s96
      %p100 = scmp.eq.s32.totalorder %s18, 0
      %p101 = por %p99, %p100
      %p102 = scmp.ne.s32.totalorder %s94, %s96
      %p103 = scmp.eq.s32.totalorder %s23, 1
      %p104 = por %p102, %p103
      %p105 = scmp.ne.s32.totalorder %s96, %s97
      %p106 = scmp.eq.s32.totalorder %s23, 0
      %p107 = por %p105, %p106
      %p108 = scmp.ne.s32.totalorder %s96, %s97
      %p109 = scmp.eq.s32.totalorder %s24, 1
      %p110 = por %p108, %p109
      %p112 = scmp.ne.s32.totalorder %s97, %s111
      %p113 = scmp.eq.s32.totalorder %s24, 0
      %p114 = por %p112, %p113
      %s116 = sadd.s32 %s115, 1
      %p119 = scmp.eq.s32.totalorder %s18, 1
      %p120 = scmp.ne.s32.totalorder %s115, %s117
      %p121 = scmp.eq.s32.totalorder %s18, 0
      %p122 = por %p120, %p121
      %p123 = scmp.ne.s32.totalorder %s115, %s117
      %p124 = scmp.eq.s32.totalorder %s23, 1
      %p125 = por %p123, %p124
      %p126 = scmp.ne.s32.totalorder %s117, %s118
      %p127 = scmp.eq.s32.totalorder %s23, 0
      %p128 = por %p126, %p127
      %p129 = scmp.ne.s32.totalorder %s117, %s118
      %p130 = scmp.eq.s32.totalorder %s24, 1
      %p131 = por %p129, %p130
      %p133 = scmp.ne.s32.totalorder %s118, %s132
      %p134 = scmp.eq.s32.totalorder %s24, 0
      %p135 = por %p133, %p134
      %s136 = ssub.s32 %s18, %s25
      %p137 = scmp.eq.s32.totalorder %s136, 0
      %s139 = sadd.s32 %s138, 1
      %s140 = scalar_select %p137, %s138, %s139
      %p143 = pneg %p137
      %p144 = scmp.eq.s32.totalorder %s18, 1
      %p145 = por %p143, %p144
      %p146 = scmp.ne.s32.totalorder %s138, %s141
      %p147 = scmp.eq.s32.totalorder %s18, 0
      %p148 = por %p146, %p147
      %p149 = scmp.ne.s32.totalorder %s138, %s141
      %p150 = scmp.eq.s32.totalorder %s23, 1
      %p151 = por %p149, %p150
      %p152 = scmp.ne.s32.totalorder %s141, %s142
      %p153 = scmp.eq.s32.totalorder %s23, 0
      %p154 = por %p152, %p153
      %p155 = scmp.ne.s32.totalorder %s141, %s142
      %p156 = scmp.eq.s32.totalorder %s24, 1
      %p157 = por %p155, %p156
      %p159 = scmp.ne.s32.totalorder %s142, %s158
      %p160 = scmp.eq.s32.totalorder %s24, 0
      %p161 = por %p159, %p160
      %p162 = scmp.le.s32.totalorder 1, %s18
      %p163 = scmp.lt.s32.totalorder %s18, 3
      %p164 = pnand %p162, %p163
      %p165 = pneg %p164
      // Predicated region
      $region9: #{tpu_custom_call.1} parent=5 // pred_check
        _
      $region10: #{tpu_custom_call.1} parent=5 // pred_check_branch
        %167 = sbr.rel (%p164) target = $region12
      $region11: #{tpu_custom_call.1} parent=5 // pred_region
        %s168 = ssub.s32 %s18, 1
        // Predicated region
        $region13: #{tpu_custom_call.1} parent=11 // pred_check
          %p169 = pneg %p65
        $region14: #{tpu_custom_call.1} parent=11 // pred_check_branch
          %171 = sbr.rel (%p169) target = $region16
        $region15: #{tpu_custom_call.1} parent=11 // pred_region
          %173 = vsyncadd [#allocation6], 0
          %s174 = sshll.u32 %s1, 4
          %s175 = int_to_ptr.hbm [resolvable:$true] %s174
          %s176 = sshll.u32 [#allocation5], 4
          %s177 = int_to_ptr.vmem [resolvable:$true] %s176
          %182 = dma.hbm_to_vmem [thread:$0]  %s175, 6144, %s177, [#allocation6], 128, 128, 8
        $region16: #{tpu_custom_call.1} parent=11 // pred_fallthru
          _
        // Predicated region
        $region17: #{tpu_custom_call.1} parent=11 // pred_check
          %p183 = pneg %p86
        $region18: #{tpu_custom_call.1} parent=11 // pred_check_branch
          %185 = sbr.rel (%p183) target = $region20
        $region19: #{tpu_custom_call.1} parent=11 // pred_region
          _
        $region20: #{tpu_custom_call.1} parent=11 // pred_fallthru
          _
        // Predicated region
        $region21: #{tpu_custom_call.1} parent=11 // pred_check
          %p186 = pneg %p107
        $region22: #{tpu_custom_call.1} parent=11 // pred_check_branch
          %188 = sbr.rel (%p186) target = $region24
        $region23: #{tpu_custom_call.1} parent=11 // pred_region
          %190 = vsyncadd [#allocation6], 0
          %s191 = sshll.u32 %s3, 4
          %s192 = int_to_ptr.hbm [resolvable:$true] %s191
          %s193 = sshll.u32 [#allocation7], 4
          %s194 = int_to_ptr.vmem [resolvable:$true] %s193
          %199 = dma.hbm_to_vmem [thread:$0]  %s192, 2048, %s194, [#allocation6], 128, 128, 8
        $region24: #{tpu_custom_call.1} parent=11 // pred_fallthru
          _
        // Predicated region
        $region25: #{tpu_custom_call.1} parent=11 // pred_check
          %p200 = pneg %p128
        $region26: #{tpu_custom_call.1} parent=11 // pred_check_branch
          %202 = sbr.rel (%p200) target = $region28
        $region27: #{tpu_custom_call.1} parent=11 // pred_region
          _
        $region28: #{tpu_custom_call.1} parent=11 // pred_fallthru
          _
      $region12: #{tpu_custom_call.1} parent=5 // pred_fallthru
        _
      %p203 = scmp.lt.s32.totalorder %s18, 2
      // Predicated region
      $region29: #{tpu_custom_call.1} parent=5 // pred_check
        %p204 = pneg %p203
      $region30: #{tpu_custom_call.1} parent=5 // pred_check_branch
        %206 = sbr.rel (%p204) target = $region32
      $region31: #{tpu_custom_call.1} parent=5 // pred_region
        // Predicated region
        $region33: #{tpu_custom_call.1} parent=31 // pred_check
          %p207 = pneg %p38
        $region34: #{tpu_custom_call.1} parent=31 // pred_check_branch
          %209 = sbr.rel (%p207) target = $region36
        $region35: #{tpu_custom_call.1} parent=31 // pred_region
          %s210 = sand.u32 %s28, 1
          %s211 = scalar_lea.sflag [#allocation3], %s210
          %s212 = sand.u32 %s28, 1
          %s213 = smul.addr %s212, 24
          %s214 = scalar_lea.vmem [#allocation2], %s213
          %216 = vsyncadd %s211, 0
          %s217 = smul.addr %s18, 3
          %s218 = smul.addr %s217, 8
          %s219 = scalar_lea.hbm %s0, %s218
          %s220 = sshll.u32 %s219, 4
          %s221 = int_to_ptr.hbm [resolvable:$true] %s220
          %s222 = sshll.u32 %s214, 4
          %s223 = int_to_ptr.vmem [resolvable:$true] %s222
          %228 = dma.hbm_to_vmem [thread:$0]  %s221, 384, %s223, %s211, 128, 128, 8
        $region36: #{tpu_custom_call.1} parent=31 // pred_fallthru
          _
      $region32: #{tpu_custom_call.1} parent=5 // pred_fallthru
        _
      %p229 = scmp.le.s32.totalorder 1, %s18
      %p230 = scmp.lt.s32.totalorder %s18, 3
      %p231 = pnand %p229, %p230
      %p232 = pneg %p231
      // Predicated region
      $region37: #{tpu_custom_call.1} parent=5 // pred_check
        _
      $region38: #{tpu_custom_call.1} parent=5 // pred_check_branch
        %234 = sbr.rel (%p231) target = $region40
      $region39: #{tpu_custom_call.1} parent=5 // pred_region
        %s235 = ssub.s32 %s18, 1
        %s236 = sand.u32 %s31, 1
        %s237 = scalar_lea.sflag [#allocation3], %s236
        %s238 = sand.u32 %s31, 1
        %s239 = smul.addr %s238, 24
        %s240 = scalar_lea.vmem [#allocation2], %s239
        // Predicated region
        $region41: #{tpu_custom_call.1} parent=39 // pred_check
          %p241 = pneg %p44
        $region42: #{tpu_custom_call.1} parent=39 // pred_check_branch
          %243 = sbr.rel (%p241) target = $region44
        $region43: #{tpu_custom_call.1} parent=39 // pred_region
          %245 = dma.done %s237, 384
        $region44: #{tpu_custom_call.1} parent=39 // pred_fallthru
          _
        // Predicated region
        $region45: #{tpu_custom_call.1} parent=39 // pred_check
          %p246 = pneg %p65
        $region46: #{tpu_custom_call.1} parent=39 // pred_check_branch
          %248 = sbr.rel (%p246) target = $region48
        $region47: #{tpu_custom_call.1} parent=39 // pred_region
          %250 = dma.done [#allocation6], 6144
        $region48: #{tpu_custom_call.1} parent=39 // pred_fallthru
          _
        // Predicated region
        $region49: #{tpu_custom_call.1} parent=39 // pred_check
          %p251 = pneg %p107
        $region50: #{tpu_custom_call.1} parent=39 // pred_check_branch
          %253 = sbr.rel (%p251) target = $region52
        $region51: #{tpu_custom_call.1} parent=39 // pred_region
          %255 = dma.done [#allocation6], 2048
        $region52: #{tpu_custom_call.1} parent=39 // pred_fallthru
          _
        %s256 = sand.u32 %s31, 1
        %s257 = scalar_lea.sflag [#allocation3], %s256
        %s258 = sand.u32 %s31, 1
        %s259 = smul.addr %s258, 24
        %s260 = scalar_lea.vmem [#allocation2], %s259
        %p261 = pneg %p44
        %p262 = pneg %p41
        %p263 = pneg %p65
        %p264 = pneg %p62
        %p265 = pneg %p86
        %p266 = pneg %p83
        %p267 = pneg %p107
        %p268 = pneg %p104
        %p269 = pneg %p128
        %p270 = pneg %p125
        %p271 = pneg %p154
        %p272 = pneg %p151
        %s273 = sand.u32 %s141, 1
        %s274 = scalar_lea.sflag [#allocation4], %s273
        %s275 = sand.u32 %s141, 1
        %s276 = smul.addr %s275, 24
        %s277 = scalar_lea.vmem [#allocation8], %s276
        %v278 = vld [vmem:[%s240] sm:$0xff]
        %v279 = vld [vmem:[%s240 + $0x8] sm:$0xff]
        %v280 = vld [vmem:[%s240 + $0x10] sm:$0xff]
        %v281 = vrot.slane %v278, 1
        %v282 = vrot.slane %v279, 1
        %v283 = vrot.slane %v280, 1
        %v284 = vlaneseq
        %v285 = vshrl.u32 %v284, 7
        %vm286 = vcmp.lt.s32.totalorder %v285, 7
        %v287 = vsel %vm286, %v282, %v283
        %v288 = vsel %vm286, %v281, %v282
        %v289 = vsel %vm286, %v283, %v281
        %v290 = vrot.slane %v278, 2
        %v291 = vrot.slane %v279, 2
        %v292 = vrot.slane %v280, 2
        %vm293 = vcmp.lt.s32.totalorder %v285, 6
        %v294 = vsel %vm293, %v291, %v292
        %v295 = vsel %vm293, %v290, %v291
        %v296 = vsel %vm293, %v292, %v290
        %v297 = vld [vmem:[#allocation5] sm:$0xff]
        %v298 = vld [vmem:[#allocation5 + $0x8] sm:$0xff]
        %v299 = vld [vmem:[#allocation5 + $0x10] sm:$0xff]
        %v300 = vld [vmem:[#allocation5 + $0x18] sm:$0xff]
        %v301 = vld [vmem:[#allocation5 + $0x20] sm:$0xff]
        %v302 = vld [vmem:[#allocation5 + $0x28] sm:$0xff]
        %v303 = vld [vmem:[#allocation5 + $0x30] sm:$0xff]
        %v304 = vld [vmem:[#allocation5 + $0x38] sm:$0xff]
        %v305 = vld [vmem:[#allocation5 + $0x40] sm:$0xff]
        %v306 = vld [vmem:[#allocation5 + $0x48] sm:$0xff]
        %v307 = vld [vmem:[#allocation5 + $0x50] sm:$0xff]
        %v308 = vld [vmem:[#allocation5 + $0x58] sm:$0xff]
        %v309 = vld [vmem:[#allocation5 + $0x60] sm:$0xff]
        %v310 = vld [vmem:[#allocation5 + $0x68] sm:$0xff]
        %v311 = vld [vmem:[#allocation5 + $0x70] sm:$0xff]
        %v312 = vld [vmem:[#allocation5 + $0x78] sm:$0xff]
        %v313 = vld [vmem:[#allocation5 + $0x80] sm:$0xff]
        %v314 = vld [vmem:[#allocation5 + $0x88] sm:$0xff]
        %v315 = vld [vmem:[#allocation5 + $0x90] sm:$0xff]
        %v316 = vld [vmem:[#allocation5 + $0x98] sm:$0xff]
        %v317 = vld [vmem:[#allocation5 + $0xa0] sm:$0xff]
        %v318 = vld [vmem:[#allocation5 + $0xa8] sm:$0xff]
        %v319 = vld [vmem:[#allocation5 + $0xb0] sm:$0xff]
        %v320 = vld [vmem:[#allocation5 + $0xb8] sm:$0xff]
        %v321 = vld [vmem:[#allocation5 + $0xc0] sm:$0xff]
        %v322 = vld [vmem:[#allocation5 + $0xc8] sm:$0xff]
        %v323 = vld [vmem:[#allocation5 + $0xd0] sm:$0xff]
        %v324 = vld [vmem:[#allocation5 + $0xd8] sm:$0xff]
        %v325 = vld [vmem:[#allocation5 + $0xe0] sm:$0xff]
        %v326 = vld [vmem:[#allocation5 + $0xe8] sm:$0xff]
        %v327 = vld [vmem:[#allocation5 + $0xf0] sm:$0xff]
        %v328 = vld [vmem:[#allocation5 + $0xf8] sm:$0xff]
        %v329 = vld [vmem:[#allocation5 + $0x100] sm:$0xff]
        %v330 = vld [vmem:[#allocation5 + $0x108] sm:$0xff]
        %v331 = vld [vmem:[#allocation5 + $0x110] sm:$0xff]
        %v332 = vld [vmem:[#allocation5 + $0x118] sm:$0xff]
        %v333 = vld [vmem:[#allocation5 + $0x120] sm:$0xff]
        %v334 = vld [vmem:[#allocation5 + $0x128] sm:$0xff]
        %v335 = vld [vmem:[#allocation5 + $0x130] sm:$0xff]
        %v336 = vld [vmem:[#allocation5 + $0x138] sm:$0xff]
        %v337 = vld [vmem:[#allocation5 + $0x140] sm:$0xff]
        %v338 = vld [vmem:[#allocation5 + $0x148] sm:$0xff]
        %v339 = vld [vmem:[#allocation5 + $0x150] sm:$0xff]
        %v340 = vld [vmem:[#allocation5 + $0x158] sm:$0xff]
        %v341 = vld [vmem:[#allocation5 + $0x160] sm:$0xff]
        %v342 = vld [vmem:[#allocation5 + $0x168] sm:$0xff]
        %v343 = vld [vmem:[#allocation5 + $0x170] sm:$0xff]
        %v344 = vld [vmem:[#allocation5 + $0x178] sm:$0xff]
        %v345 = vld [vmem:[%s2] sm:$0x1]
        %v347 = vperm.slane %v345, 0
        %349 = vmatpush.msra.mxu0 %v312
        %350 = vmatpush.msra.mxu0 %v311
        %351 = vmatpush.msra.mxu0 %v310
        %352 = vmatpush.msra.mxu0 %v309
        %353 = vmatpush.msra.mxu0 %v308
        %354 = vmatpush.msra.mxu0 %v307
        %355 = vmatpush.msra.mxu0 %v306
        %356 = vmatpush.msra.mxu0 %v305
        %357 = vmatpush.msra.mxu0 %v304
        %358 = vmatpush.msra.mxu0 %v303
        %359 = vmatpush.msra.mxu0 %v302
        %360 = vmatpush.msra.mxu0 %v301
        %361 = vmatpush.msra.mxu0 %v300
        %362 = vmatpush.msra.mxu0 %v299
        %363 = vmatpush.msra.mxu0 %v298
        %364 = vmatpush.msra.mxu0 %v297
        %365 = vmatmul.f32.gmra.mxu0 %v278
        %v366 = vpop.f32.mrf.mxu0
        %v367 = vadd.f32 %v347, %v366
        %368 = vmatmul.f32.gmra.mxu0 %v279
        %v369 = vpop.f32.mrf.mxu0
        %v370 = vadd.f32 %v347, %v369
        %371 = vmatmul.f32.gmra.mxu0 %v280
        %v372 = vpop.f32.mrf.mxu0
        %v373 = vadd.f32 %v347, %v372
        %374 = vdwg.mxu0
        %375 = vmatpush.msra.mxu0 %v328
        %376 = vmatpush.msra.mxu0 %v327
        %377 = vmatpush.msra.mxu0 %v326
        %378 = vmatpush.msra.mxu0 %v325
        %379 = vmatpush.msra.mxu0 %v324
        %380 = vmatpush.msra.mxu0 %v323
        %381 = vmatpush.msra.mxu0 %v322
        %382 = vmatpush.msra.mxu0 %v321
        %383 = vmatpush.msra.mxu0 %v320
        %384 = vmatpush.msra.mxu0 %v319
        %385 = vmatpush.msra.mxu0 %v318
        %386 = vmatpush.msra.mxu0 %v317
        %387 = vmatpush.msra.mxu0 %v316
        %388 = vmatpush.msra.mxu0 %v315
        %389 = vmatpush.msra.mxu0 %v314
        %390 = vmatpush.msra.mxu0 %v313
        %391 = vmatmul.f32.gmra.mxu0 %v288
        %v392 = vpop.f32.mrf.mxu0
        %v393 = vadd.f32 %v367, %v392
        %394 = vmatmul.f32.gmra.mxu0 %v287
        %v395 = vpop.f32.mrf.mxu0
        %v396 = vadd.f32 %v370, %v395
        %397 = vmatmul.f32.gmra.mxu0 %v289
        %v398 = vpop.f32.mrf.mxu0
        %v399 = vadd.f32 %v373, %v398
        %400 = vdwg.mxu0
        %401 = vmatpush.msra.mxu0 %v344
        %402 = vmatpush.msra.mxu0 %v343
        %403 = vmatpush.msra.mxu0 %v342
        %404 = vmatpush.msra.mxu0 %v341
        %405 = vmatpush.msra.mxu0 %v340
        %406 = vmatpush.msra.mxu0 %v339
        %407 = vmatpush.msra.mxu0 %v338
        %408 = vmatpush.msra.mxu0 %v337
        %409 = vmatpush.msra.mxu0 %v336
        %410 = vmatpush.msra.mxu0 %v335
        %411 = vmatpush.msra.mxu0 %v334
        %412 = vmatpush.msra.mxu0 %v333
        %413 = vmatpush.msra.mxu0 %v332
        %414 = vmatpush.msra.mxu0 %v331
        %415 = vmatpush.msra.mxu0 %v330
        %416 = vmatpush.msra.mxu0 %v329
        %417 = vmatmul.f32.gmra.mxu0 %v295
        %v418 = vpop.f32.mrf.mxu0
        %v419 = vadd.f32 %v393, %v418
        %420 = vmatmul.f32.gmra.mxu0 %v294
        %v421 = vpop.f32.mrf.mxu0
        %v422 = vadd.f32 %v396, %v421
        %423 = vmatmul.f32.gmra.mxu0 %v296
        %v424 = vpop.f32.mrf.mxu0
        %v425 = vadd.f32 %v399, %v424
        %426 = vdwg.mxu0
        %v427 = vmul.f32 %v419, 0.2
        %v428 = vmul.f32 %v422, 0.2
        %v429 = vmul.f32 %v425, 0.2
        %v430 = vmax.f32 %v419, %v427
        %v431 = vmax.f32 %v422, %v428
        %v432 = vmax.f32 %v425, %v429
        %v433 = vld [vmem:[#allocation7] sm:$0xff]
        %v434 = vld [vmem:[#allocation7 + $0x8] sm:$0xff]
        %v435 = vld [vmem:[#allocation7 + $0x10] sm:$0xff]
        %v436 = vld [vmem:[#allocation7 + $0x18] sm:$0xff]
        %v437 = vld [vmem:[#allocation7 + $0x20] sm:$0xff]
        %v438 = vld [vmem:[#allocation7 + $0x28] sm:$0xff]
        %v439 = vld [vmem:[#allocation7 + $0x30] sm:$0xff]
        %v440 = vld [vmem:[#allocation7 + $0x38] sm:$0xff]
        %v441 = vld [vmem:[#allocation7 + $0x40] sm:$0xff]
        %v442 = vld [vmem:[#allocation7 + $0x48] sm:$0xff]
        %v443 = vld [vmem:[#allocation7 + $0x50] sm:$0xff]
        %v444 = vld [vmem:[#allocation7 + $0x58] sm:$0xff]
        %v445 = vld [vmem:[#allocation7 + $0x60] sm:$0xff]
        %v446 = vld [vmem:[#allocation7 + $0x68] sm:$0xff]
        %v447 = vld [vmem:[#allocation7 + $0x70] sm:$0xff]
        %v448 = vld [vmem:[#allocation7 + $0x78] sm:$0xff]
        %v449 = vld [vmem:[%s4] sm:$0x1]
        %v451 = vperm.slane %v449, 0
        %453 = vmatpush.msra.mxu0 %v448
        %454 = vmatpush.msra.mxu0 %v447
        %455 = vmatpush.msra.mxu0 %v446
        %456 = vmatpush.msra.mxu0 %v445
        %457 = vmatpush.msra.mxu0 %v444
        %458 = vmatpush.msra.mxu0 %v443
        %459 = vmatpush.msra.mxu0 %v442
        %460 = vmatpush.msra.mxu0 %v441
        %461 = vmatpush.msra.mxu0 %v440
        %462 = vmatpush.msra.mxu0 %v439
        %463 = vmatpush.msra.mxu0 %v438
        %464 = vmatpush.msra.mxu0 %v437
        %465 = vmatpush.msra.mxu0 %v436
        %466 = vmatpush.msra.mxu0 %v435
        %467 = vmatpush.msra.mxu0 %v434
        %468 = vmatpush.msra.mxu0 %v433
        %469 = vmatmul.f32.gmra.mxu0 %v430
        %v470 = vpop.f32.mrf.mxu0
        %v471 = vadd.f32 %v451, %v470
        %472 = vmatmul.f32.gmra.mxu0 %v431
        %v473 = vpop.f32.mrf.mxu0
        %v474 = vadd.f32 %v451, %v473
        %475 = vmatmul.f32.gmra.mxu0 %v432
        %v476 = vpop.f32.mrf.mxu0
        %v477 = vadd.f32 %v451, %v476
        %478 = vdwg.mxu0
        %v479 = vmul.f32 %v471, 0.2
        %v480 = vmul.f32 %v474, 0.2
        %v481 = vmul.f32 %v477, 0.2
        %v482 = vmax.f32 %v471, %v479
        %v483 = vmax.f32 %v474, %v480
        %v484 = vmax.f32 %v477, %v481
        %485 = vst [vmem:[%s277] sm:$0xff] %v482
        %486 = vst [vmem:[%s277 + $0x8] sm:$0xff] %v483
        %487 = vst [vmem:[%s277 + $0x10] sm:$0xff] %v484
        %s488 = sand.u32 %s141, 1
        %s489 = scalar_lea.sflag [#allocation4], %s488
        %s490 = sand.u32 %s141, 1
        %s491 = smul.addr %s490, 24
        %s492 = scalar_lea.vmem [#allocation8], %s491
        // Predicated region
        $region53: #{tpu_custom_call.1} parent=39 // pred_check
          %p493 = pneg %p151
        $region54: #{tpu_custom_call.1} parent=39 // pred_check_branch
          %495 = sbr.rel (%p493) target = $region56
        $region55: #{tpu_custom_call.1} parent=39 // pred_region
          %497 = vsyncadd %s489, 0
          %s498 = smul.addr %s23, 3
          %s499 = smul.addr %s498, 8
          %s500 = scalar_lea.hbm %s5, %s499
          %s501 = sshll.u32 %s492, 4
          %s502 = int_to_ptr.vmem [resolvable:$true] %s501
          %s503 = sshll.u32 %s500, 4
          %s504 = int_to_ptr.hbm [resolvable:$true] %s503
          %509 = dma.vmem_to_hbm [thread:$0]  %s502, 384, %s504, %s489, 128, 128, 8
        $region56: #{tpu_custom_call.1} parent=39 // pred_fallthru
          _
      $region40: #{tpu_custom_call.1} parent=5 // pred_fallthru
        _
      %p510 = scmp.le.s32.totalorder 2, %s18
      // Predicated region
      $region57: #{tpu_custom_call.1} parent=5 // pred_check
        %p511 = pneg %p510
      $region58: #{tpu_custom_call.1} parent=5 // pred_check_branch
        %513 = sbr.rel (%p511) target = $region60
      $region59: #{tpu_custom_call.1} parent=5 // pred_region
        %s514 = ssub.s32 %s18, 2
        // Predicated region
        $region61: #{tpu_custom_call.1} parent=59 // pred_check
          %p515 = pneg %p157
        $region62: #{tpu_custom_call.1} parent=59 // pred_check_branch
          %517 = sbr.rel (%p515) target = $region64
        $region63: #{tpu_custom_call.1} parent=59 // pred_region
          %s518 = sand.u32 %s142, 1
          %s519 = scalar_lea.sflag [#allocation4], %s518
          %s520 = sand.u32 %s142, 1
          %s521 = smul.addr %s520, 24
          %s522 = scalar_lea.vmem [#allocation8], %s521
          %524 = dma.done %s519, 384
        $region64: #{tpu_custom_call.1} parent=59 // pred_fallthru
          _
      $region60: #{tpu_custom_call.1} parent=5 // pred_fallthru
        _
    $region6: #{tpu_custom_call.1} parent=1 // loop_footer
      %s22 = sadd.s32 1, %s18
    $region7: #{tpu_custom_call.1} parent=1 // loop_footer_branch
      %17 = sbr.rel target = $region3
    $region8: #{tpu_custom_call.1} parent=1 // loop_exit
      _
    %525 = vsyncpa [#allocation3], 1
    %s526 = scalar_lea.sflag [#allocation3], 1
    %527 = vsyncpa %s526, 1
    %528 = vsyncpa [#allocation6], 1
    %529 = vsyncpa [#allocation4], 1
    %s530 = scalar_lea.sflag [#allocation4], 1
    %531 = vsyncpa %s530, 1

</llo_original>
